<compile_context>
chip_gen: v7x
topology: tpu7x:2x2x1
jax: 0.10.0
libtpu: 0.0.40
codegen_flags: <defaults>
</compile_context>

<pallas_src>
import functools

import jax
import jax.numpy as jnp
from jax.experimental import pallas as pl
from jax.experimental.pallas import tpu as pltpu


def _round_up(x: int, m: int) -> int:
    return ((x + m - 1) // m) * m


def _pick_tile_n(n_rows_padded: int, row_bytes: int, fixed_bytes: int,
                 budget_bytes: int = 36 * 1024 * 1024,
                 max_tile: int = 1024) -> int:
    """Largest multiple-of-8 row tile whose double-buffered footprint fits."""
    avail = max(budget_bytes - 2 * fixed_bytes, 1 << 20)
    tile = avail // (2 * max(row_bytes, 1))
    tile = min(int(tile), max_tile, n_rows_padded)
    return max((tile // 8) * 8, 8)


# ----------------------------- kernels --------------------------------------

def _shared_x_kernel(x_ref, w_ref, b_ref, o_ref):
    # x_ref: (TILE_N, D_in)        row tile, shared across the ensemble
    # w_ref: (D_in, E * D_out)     all ensemble weights, lane-packed
    # b_ref: (1, E * D_out)
    # o_ref: (TILE_N, E * D_out)   lane-dense output slab
    acc = jnp.dot(x_ref[...], w_ref[...], preferred_element_type=jnp.float32)
    o_ref[...] = (acc + b_ref[...]).astype(o_ref.dtype)


def _per_ensemble_kernel(x_ref, w_ref, b_ref, o_ref):
    # x_ref: (1, TILE_N, D_in), w_ref: (1, D_in, D_out)
    # b_ref: (1, 1, D_out),     o_ref: (1, TILE_N, D_out)
    acc = jnp.dot(x_ref[0], w_ref[0], preferred_element_type=jnp.float32)
    o_ref[0] = (acc + b_ref[0]).astype(o_ref.dtype)


# ----------------------------- wrappers --------------------------------------

def _forward_shared_x(x, weight, bias):
    """x: (N, D_in) shared across ensemble -> (E, N, D_out)."""
    n_rows, input_dim = x.shape
    num_ensemble, _, output_dim = weight.shape
    out_w = num_ensemble * output_dim
    isz = jnp.dtype(x.dtype).itemsize

    n_pad = _round_up(n_rows, 8)
    fixed_bytes = (input_dim * out_w + out_w) * isz          # resident w + b
    tile_n = _pick_tile_n(n_pad, (input_dim + out_w) * isz, fixed_bytes)
    n_pad = _round_up(n_pad, tile_n)
    if n_pad != n_rows:
        x = jnp.pad(x, ((0, n_pad - n_rows), (0, 0)))

    # Lane-pack the ensemble: column e*D_out + k holds weight[e, :, k].
    w_packed = jnp.transpose(weight, (1, 0, 2)).reshape(input_dim, out_w)
    b_packed = bias.reshape(1, out_w)

    out = pl.pallas_call(
        _shared_x_kernel,
        out_shape=jax.ShapeDtypeStruct((n_pad, out_w), x.dtype),
        grid_spec=pltpu.PrefetchScalarGridSpec(
            num_scalar_prefetch=0,
            grid=(n_pad // tile_n,),
            in_specs=[
                pl.BlockSpec((tile_n, input_dim), lambda n: (n, 0)),
                # Constant block index: weight/bias DMA'd once, stay resident.
                pl.BlockSpec((input_dim, out_w), lambda n: (0, 0)),
                pl.BlockSpec((1, out_w), lambda n: (0, 0)),
            ],
            out_specs=pl.BlockSpec((tile_n, out_w), lambda n: (n, 0)),
        ),
        compiler_params=pltpu.CompilerParams(
            dimension_semantics=("parallel",),
            vmem_limit_bytes=48 * 1024 * 1024,
        ),
    )(x, w_packed, b_packed)

    out = out.reshape(n_pad, num_ensemble, output_dim).transpose(1, 0, 2)
    return out[:, :n_rows, :]


def _forward_per_ensemble(x, weight, bias):
    """x: (E, N, D_in), one input per ensemble member -> (E, N, D_out)."""
    num_ensemble, n_rows, input_dim = x.shape
    output_dim = weight.shape[2]
    isz = jnp.dtype(x.dtype).itemsize

    n_pad = _round_up(n_rows, 8)
    fixed_bytes = (input_dim * output_dim + output_dim) * isz
    tile_n = _pick_tile_n(n_pad, (input_dim + output_dim) * isz, fixed_bytes)
    n_pad = _round_up(n_pad, tile_n)
    if n_pad != n_rows:
        x = jnp.pad(x, ((0, 0), (0, n_pad - n_rows), (0, 0)))

    # N axis last: weight/bias block index (e, 0, 0) is constant across the
    # inner N iterations, so each member's weight is fetched exactly once.
    # TODO(synk): for D_out < 128 this path still does masked sub-lane-width
    # stores; lane-packing across E is not applicable when each member has its
    # own x without a block-diagonal (E x FLOPs) weight.
    out = pl.pallas_call(
        _per_ensemble_kernel,
        out_shape=jax.ShapeDtypeStruct((num_ensemble, n_pad, output_dim),
                                       x.dtype),
        grid_spec=pltpu.PrefetchScalarGridSpec(
            num_scalar_prefetch=0,
            grid=(num_ensemble, n_pad // tile_n),
            in_specs=[
                pl.BlockSpec((1, tile_n, input_dim), lambda e, n: (e, n, 0)),
                pl.BlockSpec((1, input_dim, output_dim), lambda e, n: (e, 0, 0)),
                pl.BlockSpec((1, 1, output_dim), lambda e, n: (e, 0, 0)),
            ],
            out_specs=pl.BlockSpec((1, tile_n, output_dim),
                                   lambda e, n: (e, n, 0)),
        ),
        compiler_params=pltpu.CompilerParams(
            dimension_semantics=("parallel", "parallel"),
            vmem_limit_bytes=48 * 1024 * 1024,
        ),
    )(x, weight, bias)
    return out[:, :n_rows, :]


@functools.partial(jax.jit, static_argnames=("use_pallas",))
def ensemble_linear_forward(x, weight, bias, *, use_pallas=None):
    """Pallas implementation of EnsembleLinear.forward.

    x:      (N, D_in) or (E, N, D_in)
    weight: (E, D_in, D_out)
    bias:   (E, 1, D_out)
    returns (E, N, D_out)
    """
    num_ensemble, input_dim, output_dim = weight.shape
    if use_pallas is None:
        # pallas_call fixed launch / per-step overhead dominates tiny problems.
        n_rows = x.shape[-2]
        flops = 2 * num_ensemble * n_rows * input_dim * output_dim
        use_pallas = flops >= (1 << 22)

    if not use_pallas:
        if x.ndim == 2:
            return jnp.einsum('ij,bjk->bik', x, weight) + bias
        return jnp.einsum('bij,bjk->bik', x, weight) + bias

    if x.ndim == 2:
        return _forward_shared_x(x, weight, bias)
    return _forward_per_ensemble(x, weight, bias)


def init_ensemble_linear_params(key, input_dim, output_dim, num_ensemble,
                                dtype=jnp.float32):
    """Parameter init mirroring the PyTorch __init__ (trunc_normal weight, 0 bias)."""
    std = 1.0 / (2.0 * (input_dim ** 0.5))
    w = jax.random.truncated_normal(
        key, -2.0, 2.0, (num_ensemble, input_dim, output_dim), dtype) * std
    b = jnp.zeros((num_ensemble, 1, output_dim), dtype)
    return w, b


if __name__ == "__main__":
    key = jax.random.PRNGKey(0)
    k_w, k_x2, k_x3, k_x2b = jax.random.split(key, 4)

    num_ensemble = 4
    input_dim = 32
    output_dim = 32
    batch = 8

    weight, bias = init_ensemble_linear_params(
        k_w, input_dim, output_dim, num_ensemble)

    # --- 2-D input path: x (N, D_in) shared across ensemble (lane-packed) ---
    x2 = jax.random.normal(k_x2, (batch, input_dim), jnp.float32)
    out2 = ensemble_linear_forward(x2, weight, bias, use_pallas=True)
    jax.block_until_ready(out2)
    ref2 = jnp.einsum('ij,bjk->bik', x2, weight) + bias
    assert out2.shape == (num_ensemble, batch, output_dim)
    assert jnp.allclose(out2, ref2, atol=1e-5, rtol=1e-5)

    # --- 2-D path with N not a multiple of 8 (exercises padding) ------------
    x2b = jax.random.normal(k_x2b, (13, input_dim), jnp.float32)
    out2b = ensemble_linear_forward(x2b, weight, bias, use_pallas=True)
    jax.block_until_ready(out2b)
    ref2b = jnp.einsum('ij,bjk->bik', x2b, weight) + bias
    assert out2b.shape == (num_ensemble, 13, output_dim)
    assert jnp.allclose(out2b, ref2b, atol=1e-5, rtol=1e-5)

    # --- 3-D input path: x (E, N, D_in) --------------------------------------
    x3 = jax.random.normal(k_x3, (num_ensemble, batch, input_dim), jnp.float32)
    out3 = ensemble_linear_forward(x3, weight, bias, use_pallas=True)
    jax.block_until_ready(out3)
    ref3 = jnp.einsum('bij,bjk->bik', x3, weight) + bias
    assert out3.shape == (num_ensemble, batch, output_dim)
    assert jnp.allclose(out3, ref3, atol=1e-5, rtol=1e-5)

    # --- heuristic fallback path (tiny problem -> einsum) also stays correct -
    out_auto = ensemble_linear_forward(x2, weight, bias)
    jax.block_until_ready(out_auto)
    assert jnp.allclose(out_auto, ref2, atol=1e-5, rtol=1e-5)

    print("KERNEL_OK")
</pallas_src>

<mosaic_0001>
module attributes {stable_mosaic.version = 11 : i64} {
  func.func @_shared_x_kernel(%arg0: i32, %arg1: memref<8x32xf32, #tpu.memory_space<vmem>>, %arg2: memref<32x128xf32, #tpu.memory_space<vmem>>, %arg3: memref<1x128xf32, #tpu.memory_space<vmem>>, %arg4: memref<8x128xf32, #tpu.memory_space<vmem>>) attributes {dimension_semantics = [#tpu.dimension_semantics<parallel>], iteration_bounds = array<i64: 1>, scalar_prefetch = 0 : i64, scratch_operands = 0 : i64, tpu.core_type = #tpu.core_type<tc>, window_params = [{transform_indices = @transform_0, window_bounds = array<i64: 8, 32>}, {pipeline_mode = #tpu.pipeline_mode<synchronous>, transform_indices = @transform_1, window_bounds = array<i64: 32, 128>}, {pipeline_mode = #tpu.pipeline_mode<synchronous>, transform_indices = @transform_2, window_bounds = array<i64: 1, 128>}, {transform_indices = @transform_3, window_bounds = array<i64: 8, 128>}]} {
    %c0 = arith.constant 0 : index
    %c0_0 = arith.constant 0 : index
    %0 = vector.load %arg1[%c0, %c0_0] : memref<8x32xf32, #tpu.memory_space<vmem>>, vector<8x32xf32>
    %c0_1 = arith.constant 0 : index
    %c0_2 = arith.constant 0 : index
    %1 = vector.load %arg2[%c0_1, %c0_2] : memref<32x128xf32, #tpu.memory_space<vmem>>, vector<32x128xf32>
    %cst = arith.constant dense<0.000000e+00> : vector<8x128xf32>
    %2 = tpu.matmul %0, %1, %cst {dimension_numbers = #tpu.dot_dimension_numbers<[1], [0], [0], [1], [0, 0, 1, 1], [], []>} : vector<8x32xf32>, vector<32x128xf32>, vector<8x128xf32> -> vector<8x128xf32>
    %c0_3 = arith.constant 0 : index
    %c0_4 = arith.constant 0 : index
    %3 = vector.load %arg3[%c0_3, %c0_4] : memref<1x128xf32, #tpu.memory_space<vmem>>, vector<1x128xf32>
    %4 = vector.broadcast %3 : vector<1x128xf32> to vector<8x128xf32>
    %5 = arith.addf %2, %4 : vector<8x128xf32>
    %c0_5 = arith.constant 0 : index
    %c0_6 = arith.constant 0 : index
    %6 = vector.load %arg4[%c0_5, %c0_6] : memref<8x128xf32, #tpu.memory_space<vmem>>, vector<8x128xf32>
    tpu.vector_store %arg4[%c0_5, %c0_6], %5 {strides = array<i32>} : memref<8x128xf32, #tpu.memory_space<vmem>>, vector<8x128xf32>,
    return
  }
  func.func @transform_0(%arg0: i32) -> (i32, i32) {
    %c0_i32 = arith.constant 0 : i32
    %c0_i32_0 = arith.constant 0 : i32
    return %arg0, %c0_i32 : i32, i32
  }
  func.func @transform_1(%arg0: i32) -> (i32, i32) {
    %c0_i32 = arith.constant 0 : i32
    %c0_i32_0 = arith.constant 0 : i32
    %c0_i32_1 = arith.constant 0 : i32
    return %c0_i32, %c0_i32_0 : i32, i32
  }
  func.func @transform_2(%arg0: i32) -> (i32, i32) {
    %c0_i32 = arith.constant 0 : i32
    %c0_i32_0 = arith.constant 0 : i32
    %c0_i32_1 = arith.constant 0 : i32
    return %c0_i32, %c0_i32_0 : i32, i32
  }
  func.func @transform_3(%arg0: i32) -> (i32, i32) {
    %c0_i32 = arith.constant 0 : i32
    %c0_i32_0 = arith.constant 0 : i32
    return %arg0, %c0_i32 : i32, i32
  }
}

</mosaic_0001>

<llo_original>
// kernel: ensemble_linear_forward.1
$region0: #{ensemble_linear_forward.1}
  #allocation0 [shape = 'u32[]', space=smem, size = 0x4, offset = 0x4, fixed_abs, tag = 'smem constant byte address 0x4 - core index']
  #allocation1 [shape = 'u32[144,128]{1,0:T(1,128)}', space=vmem, size = 0x12000, scoped, tag = 'internal scratch']
  %s0 = inlined_call_operand.vmem [shape: f32[8,32], index: 0, kind: input, shape index: {}]
  %s1 = inlined_call_operand.vmem [shape: f32[32,128], index: 1, kind: input, shape index: {}]
  %s2 = inlined_call_operand.vmem [shape: f32[1,128], index: 2, kind: input, shape index: {}]
  %s3 = inlined_call_operand.vmem [shape: f32[8,128], index: 3, kind: output, shape index: {}]
  %s4 = sld [smem:[#allocation0]]
  $region22: #{ensemble_linear_forward.1} parent=0
    _
  %s6 = ssub.s32 1, %s4
  %s7 = scalar_select 0, %s6, %s4
  // Predicated region
  $region2: #{ensemble_linear_forward.1} parent=0 // pred_check
    _
  $region3: #{ensemble_linear_forward.1} parent=0 // pred_check_branch
    %9 = sbr.rel (0) target = $region5
  $region4: #{ensemble_linear_forward.1} parent=0 // pred_region
    _
  $region5: #{ensemble_linear_forward.1} parent=0 // pred_fallthru
    _
  // Predicated region
  $region6: #{ensemble_linear_forward.1} parent=0 // pred_check
    _
  $region7: #{ensemble_linear_forward.1} parent=0 // pred_check_branch
    %11 = sbr.rel (0) target = $region9
  $region8: #{ensemble_linear_forward.1} parent=0 // pred_region
    _
  $region9: #{ensemble_linear_forward.1} parent=0 // pred_fallthru
    _
  // Predicated region
  $region10: #{ensemble_linear_forward.1} parent=0 // pred_check
    _
  $region11: #{ensemble_linear_forward.1} parent=0 // pred_check_branch
    %13 = sbr.rel (0) target = $region13
  $region12: #{ensemble_linear_forward.1} parent=0 // pred_region
    _
  $region13: #{ensemble_linear_forward.1} parent=0 // pred_fallthru
    _
  %v14 = vld [vmem:[%s0] sm:$0xff]
  %v15 = vld [vmem:[%s1] sm:$0xff]
  %v16 = vld [vmem:[%s1 + $0x8] sm:$0xff]
  %v17 = vld [vmem:[%s1 + $0x10] sm:$0xff]
  %v18 = vld [vmem:[%s1 + $0x18] sm:$0xff]
  %v19 = vld [vmem:[%s2] sm:$0x1]
  %v21 = vlaneseq
  %v22 = vshrl.u32 %v21, 7
  %v23 = vsub.s32 0, %v22
  %v24 = vrot.slane %v19, %v23
  %vm26 = vcmask 261120
  %v28 = vsel %vm26, %v14, 0
  %30 = vmatprep.subr.mxu0 0.0
  %31 = vmatpush1.msra.mxu0 %v15
  %32 = vmatprep.subr.mxu0 0.0
  %33 = vmatpush1.msra.mxu0 %v16
  %34 = vmatprep.subr.mxu0 0.0
  %35 = vmatpush1.msra.mxu0 %v17
  %36 = vmatprep.subr.mxu0 0.0
  %37 = vmatpush1.msra.mxu0 %v18
  %38 = vmatprep.subr.mxu0 0.0
  %39 = vmatpush1.msra.mxu0 0.0
  %40 = vmatprep.subr.mxu0 0.0
  %41 = vmatpush1.msra.mxu0 0.0
  %42 = vmatprep.subr.mxu0 0.0
  %43 = vmatpush1.msra.mxu0 0.0
  %44 = vmatprep.subr.mxu0 0.0
  %45 = vmatpush1.msra.mxu0 0.0
  %46 = vmatprep.subr.mxu0 0.0
  %47 = vmatpush1.msra.mxu0 0.0
  %48 = vmatprep.subr.mxu0 0.0
  %49 = vmatpush1.msra.mxu0 0.0
  %50 = vmatprep.subr.mxu0 0.0
  %51 = vmatpush1.msra.mxu0 0.0
  %52 = vmatprep.subr.mxu0 0.0
  %53 = vmatpush1.msra.mxu0 0.0
  %54 = vmatprep.subr.mxu0 0.0
  %55 = vmatpush1.msra.mxu0 0.0
  %56 = vmatprep.subr.mxu0 0.0
  %57 = vmatpush1.msra.mxu0 0.0
  %58 = vmatprep.subr.mxu0 0.0
  %59 = vmatpush1.msra.mxu0 0.0
  %60 = vmatprep.subr.mxu0 0.0
  %61 = vmatpush1.msra.mxu0 0.0
  %62 = vmatprep.subr.mxu0 0.0
  %63 = vmatpush1.msra.mxu0 0.0
  %64 = vmatprep.subr.mxu0 0.0
  %65 = vmatpush1.msra.mxu0 0.0
  %66 = vmatprep.subr.mxu0 0.0
  %67 = vmatpush1.msra.mxu0 0.0
  %68 = vmatprep.subr.mxu0 0.0
  %69 = vmatpush1.msra.mxu0 0.0
  %70 = vmatprep.subr.mxu0 0.0
  %71 = vmatpush1.msra.mxu0 0.0
  %72 = vmatprep.subr.mxu0 0.0
  %73 = vmatpush1.msra.mxu0 0.0
  %74 = vmatprep.subr.mxu0 0.0
  %75 = vmatpush1.msra.mxu0 0.0
  %76 = vmatprep.subr.mxu0 0.0
  %77 = vmatpush1.msra.mxu0 0.0
  %78 = vmatprep.subr.mxu0 0.0
  %79 = vmatpush1.msra.mxu0 0.0
  %80 = vmatprep.subr.mxu0 0.0
  %81 = vmatpush1.msra.mxu0 0.0
  %82 = vmatprep.subr.mxu0 0.0
  %83 = vmatpush1.msra.mxu0 0.0
  %84 = vmatprep.subr.mxu0 0.0
  %85 = vmatpush1.msra.mxu0 0.0
  %86 = vmatprep.subr.mxu0 0.0
  %87 = vmatpush1.msra.mxu0 0.0
  %88 = vmatprep.subr.mxu0 0.0
  %89 = vmatpush1.msra.mxu0 0.0
  %90 = vmatprep.subr.mxu0 0.0
  %91 = vmatpush1.msra.mxu0 0.0
  %92 = vmatprep.subr.mxu0 0.0
  %93 = vmatpush1.msra.mxu0 0.0
  %94 = vmatprep.mubr.f32.mxu0 0.0
  %95 = vmatmul.mubr.f32.gmra.mrb[0].mxu0 %v28
  %v96 = vpop.f32.mrb[0].mxu0
  %v97 = vadd.f32 %v24, %v96
  %v98 = vpop.f32.mrb[0].mxu0
  %99 = vdwg.mxu0
  %100 = vst [vmem:[%s3] sm:$0xff] %v97
  // Predicated region
  $region14: #{ensemble_linear_forward.1} parent=0 // pred_check
    _
  $region15: #{ensemble_linear_forward.1} parent=0 // pred_check_branch
    %102 = sbr.rel (0) target = $region17
  $region16: #{ensemble_linear_forward.1} parent=0 // pred_region
    _
  $region17: #{ensemble_linear_forward.1} parent=0 // pred_fallthru
    _
  // Predicated region
  $region18: #{ensemble_linear_forward.1} parent=0 // pred_check
    _
  $region19: #{ensemble_linear_forward.1} parent=0 // pred_check_branch
    %104 = sbr.rel (0) target = $region21
  $region20: #{ensemble_linear_forward.1} parent=0 // pred_region
    _
  $region21: #{ensemble_linear_forward.1} parent=0 // pred_fallthru
    _

</llo_original>
